<compile_context>
chip_gen: v7x
topology: tpu7x:2x2x1
jax: 0.10.0
libtpu: 0.0.40
codegen_flags: <defaults>
</compile_context>

<pallas_src>
import functools

import jax
import jax.numpy as jnp
from jax.experimental import pallas as pl
from jax.experimental.pallas import tpu as pltpu


def _mmpde_kernel(s_ref, x_ref, w1_ref, b1_ref, w2t_ref, b2_ref,
                  w3t_ref, b3_ref, w4t_ref, o_ref, *, bf16_act, direct_g1):
    # SMEM scalars: [lb, ub, scale, shift, exp(ub - lb), b4]
    lb = s_ref[0]
    ub = s_ref[1]
    scale = s_ref[2]
    shift = s_ref[3]
    efac = s_ref[4]
    b4 = s_ref[5]

    x = x_ref[...]                                   # (1, TN), lane-dense
    X = x * scale + shift                            # coor_shift as one FMA

    def act(z):
        # bias add stays f32; tanh runs in bf16 on v6e/v7x (bf16 EUP) so the
        # result is already in the dtype the next MXU matmul wants.
        if bf16_act:
            return jnp.tanh(z.astype(jnp.bfloat16))
        return jnp.tanh(z)

    # Layer 1: input dim is 1 -> broadcast multiply on the VPU. (H, TN)
    h = act(w1_ref[...] * X + b1_ref[...])
    # Hidden layers: bf16 MXU matmuls with f32 accumulation, (H,H)@(H,TN).
    # (when bf16_act the .astype is a no-op: h is already bf16)
    h = act(jnp.dot(w2t_ref[...], h.astype(jnp.bfloat16),
                    preferred_element_type=jnp.float32) + b2_ref[...])
    h = act(jnp.dot(w3t_ref[...], h.astype(jnp.bfloat16),
                    preferred_element_type=jnp.float32) + b3_ref[...])
    # Output layer H -> 1 on the (idle) MXU: (1,H) @ (H,TN) -> (1, TN).
    u = jnp.dot(w4t_ref[...], h.astype(jnp.bfloat16),
                preferred_element_type=jnp.float32) + b4

    # net_u hard constraint: u = g0 * g1 * u + x.
    e0 = jnp.exp(lb - x)                             # = exp(-(x - lb))
    g0 = 1.0 - e0
    if direct_g1:
        g1 = 1.0 - jnp.exp(ub - x)                   # wide-domain safe form
    else:
        g1 = 1.0 - e0 * efac                         # = 1 - exp(-(x - ub)), 1 exp
    o_ref[...] = g0 * g1 * u + x


def _default_bf16_act():
    # bf16 tanh halves the dominant EUP cost on v6e/v7x; v5e (and older) have
    # no bf16 EUP/VPU path, so keep f32 activations there.
    try:
        kind = jax.devices()[0].device_kind.lower()
    except Exception:
        return False
    return ("v6" in kind) or ("v7" in kind)


def mmpde_forward(x, lb, ub, params, *, tile_n=4096, bf16_act=None):
    """x: (N,) or (N, 1) f32 coordinates. lb, ub: scalar-like bounds.
    params: dict of weights/biases (layers [1, H, H, H, 1]).
    Returns u with shape (N,) (matching MMPDENet.forward's .squeeze())."""
    x = jnp.asarray(x, jnp.float32).reshape(-1)
    N = x.shape[0]
    if bf16_act is None:
        bf16_act = _default_bf16_act()

    # Tile selection: lane-aligned, as big as requested, but never more than
    # half the (padded) problem so the grid keeps >= 2 "parallel" steps
    # (v7x shards them across its two TensorCores; on v5e/v6e the big tiles
    # simply amortize the ~0.35 us per-step pipeline overhead).
    half = max(128, pl.cdiv((N + 1) // 2, 128) * 128)
    tn = max(128, (min(int(tile_n), half) // 128) * 128)
    n_pad = pl.cdiv(N, tn) * tn
    # Edge padding keeps padded x inside [lb, ub] so exp/g0/g1 stay finite.
    x_row = jnp.pad(x.reshape(1, N), ((0, 0), (0, n_pad - N)), mode="edge")

    H = params["W2"].shape[0]
    lb0 = jnp.asarray(lb, jnp.float32).reshape(())
    ub0 = jnp.asarray(ub, jnp.float32).reshape(())
    width = float(ub0 - lb0)            # concrete in this (non-jitted) wrapper
    direct_g1 = width > 60.0            # exp(ub-lb) would overflow f32
    scale = 2.0 / (ub0 - lb0)
    shift = -2.0 * lb0 / (ub0 - lb0) - 1.0
    efac = jnp.exp(ub0 - lb0) if not direct_g1 else jnp.float32(1.0)
    b4 = params["b4"].astype(jnp.float32).reshape(())
    scalars = jnp.stack(
        [lb0, ub0, scale, shift, jnp.asarray(efac, jnp.float32), b4]
    ).astype(jnp.float32)

    # Column / transposed layouts so the kernel works on (H, TN) activations.
    w1c = params["W1"].astype(jnp.float32).reshape(H, 1)     # (1,H) -> (H,1)
    b1c = params["b1"].astype(jnp.float32).reshape(H, 1)
    w2t = params["W2"].T.astype(jnp.bfloat16)                # (H,H)
    b2c = params["b2"].astype(jnp.float32).reshape(H, 1)
    w3t = params["W3"].T.astype(jnp.bfloat16)                # (H,H)
    b3c = params["b3"].astype(jnp.float32).reshape(H, 1)
    w4t = params["W4"].astype(jnp.bfloat16).reshape(1, H)    # (H,1) -> (1,H)

    resident = lambda shape: pl.BlockSpec(shape, lambda i: (0, 0))
    kernel = functools.partial(_mmpde_kernel, bf16_act=bool(bf16_act),
                               direct_g1=bool(direct_g1))

    out = pl.pallas_call(
        kernel,
        out_shape=jax.ShapeDtypeStruct((1, n_pad), jnp.float32),
        grid_spec=pltpu.PrefetchScalarGridSpec(
            num_scalar_prefetch=0,
            grid=(n_pad // tn,),
            in_specs=[
                pl.BlockSpec(memory_space=pltpu.MemorySpace.SMEM),  # scalars
                pl.BlockSpec((1, tn), lambda i: (0, i)),            # x tile
                resident((H, 1)), resident((H, 1)),                 # W1^T, b1^T
                resident((H, H)), resident((H, 1)),                 # W2^T, b2^T
                resident((H, H)), resident((H, 1)),                 # W3^T, b3^T
                resident((1, H)),                                   # W4^T row
            ],
            out_specs=pl.BlockSpec((1, tn), lambda i: (0, i)),
        ),
        compiler_params=pltpu.CompilerParams(
            dimension_semantics=("parallel",),
            # Raise v5e's 16 MiB default scoped VMEM so large tiles compile;
            # stays under v7x's 64 MiB physical VMEM.
            vmem_limit_bytes=48 * 1024 * 1024),
    )(scalars, x_row, w1c, b1c, w2t, b2c, w3t, b3c, w4t)
    return out[0, :N]


def xavier_normal(key, fan_in, fan_out):
    std = jnp.sqrt(2.0 / (fan_in + fan_out)).astype(jnp.float32)
    return std * jax.random.normal(key, (fan_in, fan_out), dtype=jnp.float32)


def init_params(key, layers):
    # layers = [1, H, H, H, 1]; biases zero-initialized (as in initialize_NN).
    ks = jax.random.split(key, len(layers) - 1)
    params = {}
    for l in range(len(layers) - 1):
        params[f"W{l+1}"] = xavier_normal(ks[l], layers[l], layers[l + 1])
        params[f"b{l+1}"] = jnp.zeros((1, layers[l + 1]), dtype=jnp.float32)
    return params


def reference_forward(x, lb, ub, params):
    hp = jax.lax.Precision.HIGHEST
    X = 2.0 * (x - lb) / (ub - lb) - 1.0
    h = jnp.tanh(jnp.dot(X, params["W1"], precision=hp) + params["b1"])
    h = jnp.tanh(jnp.dot(h, params["W2"], precision=hp) + params["b2"])
    h = jnp.tanh(jnp.dot(h, params["W3"], precision=hp) + params["b3"])
    u = jnp.dot(h, params["W4"], precision=hp) + params["b4"]
    g0 = 1.0 - jnp.exp(-(x - lb))
    g1 = 1.0 - jnp.exp(-(x - ub))
    return (g0 * g1 * u + x).squeeze(-1)


# TODO(synk): grad_u / grad_2_u (autograd), monitor_func-based MMPDE residual
# loss and the Adam/LBFGS training loops are training-side code, not the
# forward pass, and are not translated here.

if __name__ == "__main__":
    key = jax.random.PRNGKey(0)
    k_param, k_x = jax.random.split(key)

    layers = [1, 32, 32, 32, 1]   # typical MMPDE PINN architecture
    N = 1000                      # exercises edge padding and a 2-step grid

    lb = jnp.array([[-1.0]], dtype=jnp.float32)   # lb / ub as in train_dict
    ub = jnp.array([[1.0]], dtype=jnp.float32)
    x = jax.random.uniform(k_x, (N, 1), dtype=jnp.float32,
                           minval=-1.0, maxval=1.0)

    params = init_params(k_param, layers)

    u = mmpde_forward(x, lb, ub, params)
    u = jax.block_until_ready(u)

    u_ref = reference_forward(x, lb, ub, params)
    assert u.shape == (N,)
    # bf16 MXU inputs (and bf16 tanh on v6e/v7x) with f32 accumulation ->
    # looser tolerance than a pure-f32 pipeline.
    err = float(jnp.max(jnp.abs(u - u_ref)))
    assert jnp.allclose(u, u_ref, atol=5e-2, rtol=5e-2), f"max abs err {err}"

    print("KERNEL_OK")
</pallas_src>

<mosaic_0001>
module attributes {stable_mosaic.version = 11 : i64} {
  func.func @_mmpde_kernel(%arg0: i32, %arg1: memref<6xf32, #tpu.memory_space<smem>>, %arg2: memref<1x512xf32, #tpu.memory_space<vmem>>, %arg3: memref<32x1xf32, #tpu.memory_space<vmem>>, %arg4: memref<32x1xf32, #tpu.memory_space<vmem>>, %arg5: memref<32x32xbf16, #tpu.memory_space<vmem>>, %arg6: memref<32x1xf32, #tpu.memory_space<vmem>>, %arg7: memref<32x32xbf16, #tpu.memory_space<vmem>>, %arg8: memref<32x1xf32, #tpu.memory_space<vmem>>, %arg9: memref<1x32xbf16, #tpu.memory_space<vmem>>, %arg10: memref<1x512xf32, #tpu.memory_space<vmem>>) attributes {dimension_semantics = [#tpu.dimension_semantics<parallel>], iteration_bounds = array<i64: 2>, scalar_prefetch = 0 : i64, scratch_operands = 0 : i64, tpu.core_type = #tpu.core_type<tc>, window_params = [{transform_indices = @transform_0, window_bounds = array<i64: 6>}, {transform_indices = @transform_1, window_bounds = array<i64: 1, 512>}, {pipeline_mode = #tpu.pipeline_mode<synchronous>, transform_indices = @transform_2, window_bounds = array<i64: 32, 1>}, {pipeline_mode = #tpu.pipeline_mode<synchronous>, transform_indices = @transform_3, window_bounds = array<i64: 32, 1>}, {pipeline_mode = #tpu.pipeline_mode<synchronous>, transform_indices = @transform_4, window_bounds = array<i64: 32, 32>}, {pipeline_mode = #tpu.pipeline_mode<synchronous>, transform_indices = @transform_5, window_bounds = array<i64: 32, 1>}, {pipeline_mode = #tpu.pipeline_mode<synchronous>, transform_indices = @transform_6, window_bounds = array<i64: 32, 32>}, {pipeline_mode = #tpu.pipeline_mode<synchronous>, transform_indices = @transform_7, window_bounds = array<i64: 32, 1>}, {pipeline_mode = #tpu.pipeline_mode<synchronous>, transform_indices = @transform_8, window_bounds = array<i64: 1, 32>}, {transform_indices = @transform_9, window_bounds = array<i64: 1, 512>}]} {
    %c0 = arith.constant 0 : index
    %0 = memref.load %arg1[%c0] : memref<6xf32, #tpu.memory_space<smem>>
    %c2 = arith.constant 2 : index
    %1 = memref.load %arg1[%c2] : memref<6xf32, #tpu.memory_space<smem>>
    %c3 = arith.constant 3 : index
    %2 = memref.load %arg1[%c3] : memref<6xf32, #tpu.memory_space<smem>>
    %c4 = arith.constant 4 : index
    %3 = memref.load %arg1[%c4] : memref<6xf32, #tpu.memory_space<smem>>
    %c5 = arith.constant 5 : index
    %4 = memref.load %arg1[%c5] : memref<6xf32, #tpu.memory_space<smem>>
    %c0_0 = arith.constant 0 : index
    %c0_1 = arith.constant 0 : index
    %5 = vector.load %arg2[%c0_0, %c0_1] : memref<1x512xf32, #tpu.memory_space<vmem>>, vector<1x512xf32>
    %6 = vector.broadcast %1 : f32 to vector<1x512xf32>
    %7 = arith.mulf %5, %6 : vector<1x512xf32>
    %8 = vector.broadcast %2 : f32 to vector<1x512xf32>
    %9 = arith.addf %7, %8 : vector<1x512xf32>
    %c0_2 = arith.constant 0 : index
    %c0_3 = arith.constant 0 : index
    %10 = vector.load %arg3[%c0_2, %c0_3] : memref<32x1xf32, #tpu.memory_space<vmem>>, vector<32x1xf32>
    %11 = vector.broadcast %10 : vector<32x1xf32> to vector<32x512xf32>
    %12 = vector.broadcast %9 : vector<1x512xf32> to vector<32x512xf32>
    %13 = arith.mulf %11, %12 : vector<32x512xf32>
    %c0_4 = arith.constant 0 : index
    %c0_5 = arith.constant 0 : index
    %14 = vector.load %arg4[%c0_4, %c0_5] : memref<32x1xf32, #tpu.memory_space<vmem>>, vector<32x1xf32>
    %15 = vector.broadcast %14 : vector<32x1xf32> to vector<32x512xf32>
    %16 = arith.addf %13, %15 : vector<32x512xf32>
    %17 = math.tanh %16 : vector<32x512xf32>
    %c0_6 = arith.constant 0 : index
    %c0_7 = arith.constant 0 : index
    %18 = vector.load %arg5[%c0_6, %c0_7] : memref<32x32xbf16, #tpu.memory_space<vmem>>, vector<32x32xbf16>
    %19 = arith.truncf %17 : vector<32x512xf32> to vector<32x512xbf16>
    %cst = arith.constant dense<0.000000e+00> : vector<32x512xf32>
    %20 = tpu.matmul %18, %19, %cst {dimension_numbers = #tpu.dot_dimension_numbers<[1], [0], [0], [1], [0, 0, 1, 1], [], []>} : vector<32x32xbf16>, vector<32x512xbf16>, vector<32x512xf32> -> vector<32x512xf32>
    %c0_8 = arith.constant 0 : index
    %c0_9 = arith.constant 0 : index
    %21 = vector.load %arg6[%c0_8, %c0_9] : memref<32x1xf32, #tpu.memory_space<vmem>>, vector<32x1xf32>
    %22 = vector.broadcast %21 : vector<32x1xf32> to vector<32x512xf32>
    %23 = arith.addf %20, %22 : vector<32x512xf32>
    %24 = math.tanh %23 : vector<32x512xf32>
    %c0_10 = arith.constant 0 : index
    %c0_11 = arith.constant 0 : index
    %25 = vector.load %arg7[%c0_10, %c0_11] : memref<32x32xbf16, #tpu.memory_space<vmem>>, vector<32x32xbf16>
    %26 = arith.truncf %24 : vector<32x512xf32> to vector<32x512xbf16>
    %cst_12 = arith.constant dense<0.000000e+00> : vector<32x512xf32>
    %27 = tpu.matmul %25, %26, %cst_12 {dimension_numbers = #tpu.dot_dimension_numbers<[1], [0], [0], [1], [0, 0, 1, 1], [], []>} : vector<32x32xbf16>, vector<32x512xbf16>, vector<32x512xf32> -> vector<32x512xf32>
    %c0_13 = arith.constant 0 : index
    %c0_14 = arith.constant 0 : index
    %28 = vector.load %arg8[%c0_13, %c0_14] : memref<32x1xf32, #tpu.memory_space<vmem>>, vector<32x1xf32>
    %29 = vector.broadcast %28 : vector<32x1xf32> to vector<32x512xf32>
    %30 = arith.addf %27, %29 : vector<32x512xf32>
    %31 = math.tanh %30 : vector<32x512xf32>
    %c0_15 = arith.constant 0 : index
    %c0_16 = arith.constant 0 : index
    %32 = vector.load %arg9[%c0_15, %c0_16] : memref<1x32xbf16, #tpu.memory_space<vmem>>, vector<1x32xbf16>
    %33 = arith.truncf %31 : vector<32x512xf32> to vector<32x512xbf16>
    %cst_17 = arith.constant dense<0.000000e+00> : vector<1x512xf32>
    %34 = tpu.matmul %32, %33, %cst_17 {dimension_numbers = #tpu.dot_dimension_numbers<[1], [0], [0], [1], [0, 0, 1, 1], [], []>} : vector<1x32xbf16>, vector<32x512xbf16>, vector<1x512xf32> -> vector<1x512xf32>
    %35 = vector.broadcast %4 : f32 to vector<1x512xf32>
    %36 = arith.addf %34, %35 : vector<1x512xf32>
    %37 = vector.broadcast %0 : f32 to vector<1x512xf32>
    %38 = arith.subf %37, %5 : vector<1x512xf32>
    %39 = math.exp %38 : vector<1x512xf32>
    %cst_18 = arith.constant 1.000000e+00 : f32
    %40 = vector.broadcast %cst_18 : f32 to vector<1x512xf32>
    %41 = arith.subf %40, %39 : vector<1x512xf32>
    %42 = vector.broadcast %3 : f32 to vector<1x512xf32>
    %43 = arith.mulf %39, %42 : vector<1x512xf32>
    %cst_19 = arith.constant 1.000000e+00 : f32
    %44 = vector.broadcast %cst_19 : f32 to vector<1x512xf32>
    %45 = arith.subf %44, %43 : vector<1x512xf32>
    %46 = arith.mulf %41, %45 : vector<1x512xf32>
    %47 = arith.mulf %46, %36 : vector<1x512xf32>
    %48 = arith.addf %47, %5 : vector<1x512xf32>
    %c0_20 = arith.constant 0 : index
    %c0_21 = arith.constant 0 : index
    %49 = vector.load %arg10[%c0_20, %c0_21] : memref<1x512xf32, #tpu.memory_space<vmem>>, vector<1x512xf32>
    tpu.vector_store %arg10[%c0_20, %c0_21], %48 {strides = array<i32>} : memref<1x512xf32, #tpu.memory_space<vmem>>, vector<1x512xf32>,
    return
  }
  func.func @transform_0(%arg0: i32) -> i32 {
    %c0_i32 = arith.constant 0 : i32
    %c0_i32_0 = arith.constant 0 : i32
    return %c0_i32 : i32
  }
  func.func @transform_1(%arg0: i32) -> (i32, i32) {
    %c0_i32 = arith.constant 0 : i32
    %c0_i32_0 = arith.constant 0 : i32
    return %c0_i32, %arg0 : i32, i32
  }
  func.func @transform_2(%arg0: i32) -> (i32, i32) {
    %c0_i32 = arith.constant 0 : i32
    %c0_i32_0 = arith.constant 0 : i32
    %c0_i32_1 = arith.constant 0 : i32
    return %c0_i32, %c0_i32_0 : i32, i32
  }
  func.func @transform_3(%arg0: i32) -> (i32, i32) {
    %c0_i32 = arith.constant 0 : i32
    %c0_i32_0 = arith.constant 0 : i32
    %c0_i32_1 = arith.constant 0 : i32
    return %c0_i32, %c0_i32_0 : i32, i32
  }
  func.func @transform_4(%arg0: i32) -> (i32, i32) {
    %c0_i32 = arith.constant 0 : i32
    %c0_i32_0 = arith.constant 0 : i32
    %c0_i32_1 = arith.constant 0 : i32
    return %c0_i32, %c0_i32_0 : i32, i32
  }
  func.func @transform_5(%arg0: i32) -> (i32, i32) {
    %c0_i32 = arith.constant 0 : i32
    %c0_i32_0 = arith.constant 0 : i32
    %c0_i32_1 = arith.constant 0 : i32
    return %c0_i32, %c0_i32_0 : i32, i32
  }
  func.func @transform_6(%arg0: i32) -> (i32, i32) {
    %c0_i32 = arith.constant 0 : i32
    %c0_i32_0 = arith.constant 0 : i32
    %c0_i32_1 = arith.constant 0 : i32
    return %c0_i32, %c0_i32_0 : i32, i32
  }
  func.func @transform_7(%arg0: i32) -> (i32, i32) {
    %c0_i32 = arith.constant 0 : i32
    %c0_i32_0 = arith.constant 0 : i32
    %c0_i32_1 = arith.constant 0 : i32
    return %c0_i32, %c0_i32_0 : i32, i32
  }
  func.func @transform_8(%arg0: i32) -> (i32, i32) {
    %c0_i32 = arith.constant 0 : i32
    %c0_i32_0 = arith.constant 0 : i32
    %c0_i32_1 = arith.constant 0 : i32
    return %c0_i32, %c0_i32_0 : i32, i32
  }
  func.func @transform_9(%arg0: i32) -> (i32, i32) {
    %c0_i32 = arith.constant 0 : i32
    %c0_i32_0 = arith.constant 0 : i32
    return %c0_i32, %arg0 : i32, i32
  }
}

</mosaic_0001>

<llo_original>
// kernel: tpu_custom_call.1
$region0: #{tpu_custom_call.1}
  #allocation0 [shape = 'u32[]', space=smem, size = 0x4, offset = 0x4, fixed_abs, tag = 'smem constant byte address 0x4 - core index']
  #allocation1 [shape = 'u32[144,128]{1,0:T(1,128)}', space=vmem, size = 0x12000, scoped, tag = 'internal scratch']
  %s0 = inlined_call_operand.vmem [shape: f32[6], index: 0, kind: input, shape index: {}]
  %s1 = inlined_call_operand.vmem [shape: f32[1,1024], index: 1, kind: input, shape index: {}]
  %s2 = inlined_call_operand.vmem [shape: f32[32,1], index: 2, kind: input, shape index: {}]
  %s3 = inlined_call_operand.vmem [shape: f32[32,1], index: 3, kind: input, shape index: {}]
  %s4 = inlined_call_operand.vmem [shape: bf16[32,32], index: 4, kind: input, shape index: {}]
  %s5 = inlined_call_operand.vmem [shape: f32[32,1], index: 5, kind: input, shape index: {}]
  %s6 = inlined_call_operand.vmem [shape: bf16[32,32], index: 6, kind: input, shape index: {}]
  %s7 = inlined_call_operand.vmem [shape: f32[32,1], index: 7, kind: input, shape index: {}]
  %s8 = inlined_call_operand.vmem [shape: bf16[1,32], index: 8, kind: input, shape index: {}]
  %s9 = inlined_call_operand.hbm [shape: f32[1,1024], index: 9, kind: output, shape index: {}]
  %s10 = sld [smem:[#allocation0]]
  $region73: #{tpu_custom_call.1} parent=0
    _
  %s12 = ssub.s32 1, %s10
  %s13 = scalar_select 0, %s12, %s10
  $region1: #{tpu_custom_call.1} parent=0
    #allocation2 [shape = 'u8[512]{0}', space=smem, size = 0x200, scoped, tag = 'input window, operand 0, single buffered']
    #allocation3 [shape = 's32[2]{0}', space=sflag, size = 0x8, scoped, tag = 'scoped memory for tpu_custom_call.1']
    #allocation4 [shape = 's32[2]{0}', space=sflag, size = 0x8, scoped, tag = 'scoped memory for tpu_custom_call.1']
    #allocation5 [shape = 'u8[4096]{0}', space=vmem, size = 0x1000, scoped, tag = 'output window, operand 0']
    %14 = vsyncpa [#allocation4], 0
    %15 = vsyncpa [#allocation3], 0
    %s16 = scalar_lea.sflag [#allocation3], 1
    %17 = vsyncpa %s16, 0
    loop: start=0, step=1, limit=4
    $region2: #{tpu_custom_call.1} parent=1 // loop_pre_header
      _
    $region3: #{tpu_custom_call.1} parent=1 // loop_header
      %s19 = sphi 0, %s23
      %p20 = scmp.ge.s32.totalorder %s19, 4
      %s27 = sphi 0, %s27
      %s29 = sphi 0, %s27
      %s30 = sphi 0, %s29
      %s44 = sphi 0, %s30
      %s50 = sphi 0, %s52
      %s53 = sphi 0, %s50
      %s54 = sphi 0, %s53
      %s70 = sphi 0, %s54
      %s74 = sphi 0, %s74
      %s76 = sphi 0, %s74
      %s77 = sphi 0, %s76
      %s91 = sphi 0, %s77
      %s95 = sphi 0, %s95
      %s97 = sphi 0, %s95
      %s98 = sphi 0, %s97
      %s112 = sphi 0, %s98
      %s116 = sphi 0, %s116
      %s118 = sphi 0, %s116
      %s119 = sphi 0, %s118
      %s133 = sphi 0, %s119
      %s137 = sphi 0, %s137
      %s139 = sphi 0, %s137
      %s140 = sphi 0, %s139
      %s154 = sphi 0, %s140
      %s158 = sphi 0, %s158
      %s160 = sphi 0, %s158
      %s161 = sphi 0, %s160
      %s175 = sphi 0, %s161
      %s179 = sphi 0, %s179
      %s181 = sphi 0, %s179
      %s182 = sphi 0, %s181
      %s196 = sphi 0, %s182
      %s200 = sphi 0, %s200
      %s202 = sphi 0, %s200
      %s203 = sphi 0, %s202
      %s217 = sphi 0, %s203
      %s223 = sphi 0, %s225
      %s226 = sphi 0, %s223
      %s227 = sphi 0, %s226
      %s243 = sphi 0, %s227
    $region4: #{tpu_custom_call.1} parent=1 // loop_header_branch
      %22 = sbr.rel (%p20) target = $region8
    $region5: #{tpu_custom_call.1} parent=1 // loop_body
      %s24 = ssub.s32 %s19, 1
      %s25 = ssub.s32 %s19, 2
      %s26 = sadd.s32 %s19, 1
      %s28 = sadd.s32 %s27, 1
      %p31 = scmp.eq.s32.totalorder %s19, 1
      %p32 = scmp.ne.s32.totalorder %s27, %s29
      %p33 = scmp.eq.s32.totalorder %s19, 0
      %p34 = por %p32, %p33
      %p35 = scmp.ne.s32.totalorder %s27, %s29
      %p36 = scmp.eq.s32.totalorder %s24, 1
      %p37 = por %p35, %p36
      %p38 = scmp.ne.s32.totalorder %s29, %s30
      %p39 = scmp.eq.s32.totalorder %s24, 0
      %p40 = por %p38, %p39
      %p41 = scmp.ne.s32.totalorder %s29, %s30
      %p42 = scmp.eq.s32.totalorder %s25, 1
      %p43 = por %p41, %p42
      %p45 = scmp.ne.s32.totalorder %s30, %s44
      %p46 = scmp.eq.s32.totalorder %s25, 0
      %p47 = por %p45, %p46
      %s48 = ssub.s32 %s19, %s26
      %p49 = scmp.eq.s32.totalorder %s48, 0
      %s51 = sadd.s32 %s50, 1
      %s52 = scalar_select %p49, %s50, %s51
      %p55 = pneg %p49
      %p56 = scmp.eq.s32.totalorder %s19, 1
      %p57 = por %p55, %p56
      %p58 = scmp.ne.s32.totalorder %s50, %s53
      %p59 = scmp.eq.s32.totalorder %s19, 0
      %p60 = por %p58, %p59
      %p61 = scmp.ne.s32.totalorder %s50, %s53
      %p62 = scmp.eq.s32.totalorder %s24, 1
      %p63 = por %p61, %p62
      %p64 = scmp.ne.s32.totalorder %s53, %s54
      %p65 = scmp.eq.s32.totalorder %s24, 0
      %p66 = por %p64, %p65
      %p67 = scmp.ne.s32.totalorder %s53, %s54
      %p68 = scmp.eq.s32.totalorder %s25, 1
      %p69 = por %p67, %p68
      %p71 = scmp.ne.s32.totalorder %s54, %s70
      %p72 = scmp.eq.s32.totalorder %s25, 0
      %p73 = por %p71, %p72
      %s75 = sadd.s32 %s74, 1
      %p78 = scmp.eq.s32.totalorder %s19, 1
      %p79 = scmp.ne.s32.totalorder %s74, %s76
      %p80 = scmp.eq.s32.totalorder %s19, 0
      %p81 = por %p79, %p80
      %p82 = scmp.ne.s32.totalorder %s74, %s76
      %p83 = scmp.eq.s32.totalorder %s24, 1
      %p84 = por %p82, %p83
      %p85 = scmp.ne.s32.totalorder %s76, %s77
      %p86 = scmp.eq.s32.totalorder %s24, 0
      %p87 = por %p85, %p86
      %p88 = scmp.ne.s32.totalorder %s76, %s77
      %p89 = scmp.eq.s32.totalorder %s25, 1
      %p90 = por %p88, %p89
      %p92 = scmp.ne.s32.totalorder %s77, %s91
      %p93 = scmp.eq.s32.totalorder %s25, 0
      %p94 = por %p92, %p93
      %s96 = sadd.s32 %s95, 1
      %p99 = scmp.eq.s32.totalorder %s19, 1
      %p100 = scmp.ne.s32.totalorder %s95, %s97
      %p101 = scmp.eq.s32.totalorder %s19, 0
      %p102 = por %p100, %p101
      %p103 = scmp.ne.s32.totalorder %s95, %s97
      %p104 = scmp.eq.s32.totalorder %s24, 1
      %p105 = por %p103, %p104
      %p106 = scmp.ne.s32.totalorder %s97, %s98
      %p107 = scmp.eq.s32.totalorder %s24, 0
      %p108 = por %p106, %p107
      %p109 = scmp.ne.s32.totalorder %s97, %s98
      %p110 = scmp.eq.s32.totalorder %s25, 1
      %p111 = por %p109, %p110
      %p113 = scmp.ne.s32.totalorder %s98, %s112
      %p114 = scmp.eq.s32.totalorder %s25, 0
      %p115 = por %p113, %p114
      %s117 = sadd.s32 %s116, 1
      %p120 = scmp.eq.s32.totalorder %s19, 1
      %p121 = scmp.ne.s32.totalorder %s116, %s118
      %p122 = scmp.eq.s32.totalorder %s19, 0
      %p123 = por %p121, %p122
      %p124 = scmp.ne.s32.totalorder %s116, %s118
      %p125 = scmp.eq.s32.totalorder %s24, 1
      %p126 = por %p124, %p125
      %p127 = scmp.ne.s32.totalorder %s118, %s119
      %p128 = scmp.eq.s32.totalorder %s24, 0
      %p129 = por %p127, %p128
      %p130 = scmp.ne.s32.totalorder %s118, %s119
      %p131 = scmp.eq.s32.totalorder %s25, 1
      %p132 = por %p130, %p131
      %p134 = scmp.ne.s32.totalorder %s119, %s133
      %p135 = scmp.eq.s32.totalorder %s25, 0
      %p136 = por %p134, %p135
      %s138 = sadd.s32 %s137, 1
      %p141 = scmp.eq.s32.totalorder %s19, 1
      %p142 = scmp.ne.s32.totalorder %s137, %s139
      %p143 = scmp.eq.s32.totalorder %s19, 0
      %p144 = por %p142, %p143
      %p145 = scmp.ne.s32.totalorder %s137, %s139
      %p146 = scmp.eq.s32.totalorder %s24, 1
      %p147 = por %p145, %p146
      %p148 = scmp.ne.s32.totalorder %s139, %s140
      %p149 = scmp.eq.s32.totalorder %s24, 0
      %p150 = por %p148, %p149
      %p151 = scmp.ne.s32.totalorder %s139, %s140
      %p152 = scmp.eq.s32.totalorder %s25, 1
      %p153 = por %p151, %p152
      %p155 = scmp.ne.s32.totalorder %s140, %s154
      %p156 = scmp.eq.s32.totalorder %s25, 0
      %p157 = por %p155, %p156
      %s159 = sadd.s32 %s158, 1
      %p162 = scmp.eq.s32.totalorder %s19, 1
      %p163 = scmp.ne.s32.totalorder %s158, %s160
      %p164 = scmp.eq.s32.totalorder %s19, 0
      %p165 = por %p163, %p164
      %p166 = scmp.ne.s32.totalorder %s158, %s160
      %p167 = scmp.eq.s32.totalorder %s24, 1
      %p168 = por %p166, %p167
      %p169 = scmp.ne.s32.totalorder %s160, %s161
      %p170 = scmp.eq.s32.totalorder %s24, 0
      %p171 = por %p169, %p170
      %p172 = scmp.ne.s32.totalorder %s160, %s161
      %p173 = scmp.eq.s32.totalorder %s25, 1
      %p174 = por %p172, %p173
      %p176 = scmp.ne.s32.totalorder %s161, %s175
      %p177 = scmp.eq.s32.totalorder %s25, 0
      %p178 = por %p176, %p177
      %s180 = sadd.s32 %s179, 1
      %p183 = scmp.eq.s32.totalorder %s19, 1
      %p184 = scmp.ne.s32.totalorder %s179, %s181
      %p185 = scmp.eq.s32.totalorder %s19, 0
      %p186 = por %p184, %p185
      %p187 = scmp.ne.s32.totalorder %s179, %s181
      %p188 = scmp.eq.s32.totalorder %s24, 1
      %p189 = por %p187, %p188
      %p190 = scmp.ne.s32.totalorder %s181, %s182
      %p191 = scmp.eq.s32.totalorder %s24, 0
      %p192 = por %p190, %p191
      %p193 = scmp.ne.s32.totalorder %s181, %s182
      %p194 = scmp.eq.s32.totalorder %s25, 1
      %p195 = por %p193, %p194
      %p197 = scmp.ne.s32.totalorder %s182, %s196
      %p198 = scmp.eq.s32.totalorder %s25, 0
      %p199 = por %p197, %p198
      %s201 = sadd.s32 %s200, 1
      %p204 = scmp.eq.s32.totalorder %s19, 1
      %p205 = scmp.ne.s32.totalorder %s200, %s202
      %p206 = scmp.eq.s32.totalorder %s19, 0
      %p207 = por %p205, %p206
      %p208 = scmp.ne.s32.totalorder %s200, %s202
      %p209 = scmp.eq.s32.totalorder %s24, 1
      %p210 = por %p208, %p209
      %p211 = scmp.ne.s32.totalorder %s202, %s203
      %p212 = scmp.eq.s32.totalorder %s24, 0
      %p213 = por %p211, %p212
      %p214 = scmp.ne.s32.totalorder %s202, %s203
      %p215 = scmp.eq.s32.totalorder %s25, 1
      %p216 = por %p214, %p215
      %p218 = scmp.ne.s32.totalorder %s203, %s217
      %p219 = scmp.eq.s32.totalorder %s25, 0
      %p220 = por %p218, %p219
      %s221 = ssub.s32 %s19, %s26
      %p222 = scmp.eq.s32.totalorder %s221, 0
      %s224 = sadd.s32 %s223, 1
      %s225 = scalar_select %p222, %s223, %s224
      %p228 = pneg %p222
      %p229 = scmp.eq.s32.totalorder %s19, 1
      %p230 = por %p228, %p229
      %p231 = scmp.ne.s32.totalorder %s223, %s226
      %p232 = scmp.eq.s32.totalorder %s19, 0
      %p233 = por %p231, %p232
      %p234 = scmp.ne.s32.totalorder %s223, %s226
      %p235 = scmp.eq.s32.totalorder %s24, 1
      %p236 = por %p234, %p235
      %p237 = scmp.ne.s32.totalorder %s226, %s227
      %p238 = scmp.eq.s32.totalorder %s24, 0
      %p239 = por %p237, %p238
      %p240 = scmp.ne.s32.totalorder %s226, %s227
      %p241 = scmp.eq.s32.totalorder %s25, 1
      %p242 = por %p240, %p241
      %p244 = scmp.ne.s32.totalorder %s227, %s243
      %p245 = scmp.eq.s32.totalorder %s25, 0
      %p246 = por %p244, %p245
      %p247 = scmp.le.s32.totalorder 1, %s19
      %p248 = scmp.lt.s32.totalorder %s19, 3
      %p249 = pnand %p247, %p248
      %p250 = pneg %p249
      // Predicated region
      $region9: #{tpu_custom_call.1} parent=5 // pred_check
        _
      $region10: #{tpu_custom_call.1} parent=5 // pred_check_branch
        %252 = sbr.rel (%p249) target = $region12
      $region11: #{tpu_custom_call.1} parent=5 // pred_region
        %s253 = ssub.s32 %s19, 1
        // Predicated region
        $region13: #{tpu_custom_call.1} parent=11 // pred_check
          %p254 = pneg %p40
        $region14: #{tpu_custom_call.1} parent=11 // pred_check_branch
          %256 = sbr.rel (%p254) target = $region16
        $region15: #{tpu_custom_call.1} parent=11 // pred_region
          %s258 = ssub.s32 16, 16
          %259 = vsyncadd [#allocation4], %s258
          %s261 = sshll.u32 %s0, 4
          %s262 = int_to_ptr.vmem [resolvable:$true] %s261
          %264 = dma.vmem_to_smem %s262, 16, [#allocation2], [#allocation4]
        $region16: #{tpu_custom_call.1} parent=11 // pred_fallthru
          _
        // Predicated region
        $region17: #{tpu_custom_call.1} parent=11 // pred_check
          %p265 = pneg %p87
        $region18: #{tpu_custom_call.1} parent=11 // pred_check_branch
          %267 = sbr.rel (%p265) target = $region20
        $region19: #{tpu_custom_call.1} parent=11 // pred_region
          _
        $region20: #{tpu_custom_call.1} parent=11 // pred_fallthru
          _
        // Predicated region
        $region21: #{tpu_custom_call.1} parent=11 // pred_check
          %p268 = pneg %p108
        $region22: #{tpu_custom_call.1} parent=11 // pred_check_branch
          %270 = sbr.rel (%p268) target = $region24
        $region23: #{tpu_custom_call.1} parent=11 // pred_region
          _
        $region24: #{tpu_custom_call.1} parent=11 // pred_fallthru
          _
        // Predicated region
        $region25: #{tpu_custom_call.1} parent=11 // pred_check
          %p271 = pneg %p129
        $region26: #{tpu_custom_call.1} parent=11 // pred_check_branch
          %273 = sbr.rel (%p271) target = $region28
        $region27: #{tpu_custom_call.1} parent=11 // pred_region
          _
        $region28: #{tpu_custom_call.1} parent=11 // pred_fallthru
          _
        // Predicated region
        $region29: #{tpu_custom_call.1} parent=11 // pred_check
          %p274 = pneg %p150
        $region30: #{tpu_custom_call.1} parent=11 // pred_check_branch
          %276 = sbr.rel (%p274) target = $region32
        $region31: #{tpu_custom_call.1} parent=11 // pred_region
          _
        $region32: #{tpu_custom_call.1} parent=11 // pred_fallthru
          _
        // Predicated region
        $region33: #{tpu_custom_call.1} parent=11 // pred_check
          %p277 = pneg %p171
        $region34: #{tpu_custom_call.1} parent=11 // pred_check_branch
          %279 = sbr.rel (%p277) target = $region36
        $region35: #{tpu_custom_call.1} parent=11 // pred_region
          _
        $region36: #{tpu_custom_call.1} parent=11 // pred_fallthru
          _
        // Predicated region
        $region37: #{tpu_custom_call.1} parent=11 // pred_check
          %p280 = pneg %p192
        $region38: #{tpu_custom_call.1} parent=11 // pred_check_branch
          %282 = sbr.rel (%p280) target = $region40
        $region39: #{tpu_custom_call.1} parent=11 // pred_region
          _
        $region40: #{tpu_custom_call.1} parent=11 // pred_fallthru
          _
        // Predicated region
        $region41: #{tpu_custom_call.1} parent=11 // pred_check
          %p283 = pneg %p213
        $region42: #{tpu_custom_call.1} parent=11 // pred_check_branch
          %285 = sbr.rel (%p283) target = $region44
        $region43: #{tpu_custom_call.1} parent=11 // pred_region
          _
        $region44: #{tpu_custom_call.1} parent=11 // pred_fallthru
          _
      $region12: #{tpu_custom_call.1} parent=5 // pred_fallthru
        _
      %p286 = scmp.lt.s32.totalorder %s19, 2
      // Predicated region
      $region45: #{tpu_custom_call.1} parent=5 // pred_check
        %p287 = pneg %p286
      $region46: #{tpu_custom_call.1} parent=5 // pred_check_branch
        %289 = sbr.rel (%p287) target = $region48
      $region47: #{tpu_custom_call.1} parent=5 // pred_region
        // Predicated region
        $region49: #{tpu_custom_call.1} parent=47 // pred_check
          %p290 = pneg %p60
        $region50: #{tpu_custom_call.1} parent=47 // pred_check_branch
          %292 = sbr.rel (%p290) target = $region52
        $region51: #{tpu_custom_call.1} parent=47 // pred_region
          %s293 = smul.u32 4, %s19
          %p294 = scmp.lt.s32.totalorder %s293, 7
          %s295 = scalar_select %p294, %s293, 7
          %s296 = scalar_lea.vmem %s1, %s295
          %s297 = smul.u32 4, %s19
        $region52: #{tpu_custom_call.1} parent=47 // pred_fallthru
          _
      $region48: #{tpu_custom_call.1} parent=5 // pred_fallthru
        _
      %p298 = scmp.le.s32.totalorder 1, %s19
      %p299 = scmp.lt.s32.totalorder %s19, 3
      %p300 = pnand %p298, %p299
      %p301 = pneg %p300
      // Predicated region
      $region53: #{tpu_custom_call.1} parent=5 // pred_check
        _
      $region54: #{tpu_custom_call.1} parent=5 // pred_check_branch
        %303 = sbr.rel (%p300) target = $region56
      $region55: #{tpu_custom_call.1} parent=5 // pred_region
        %s304 = ssub.s32 %s19, 1
        // Predicated region
        $region57: #{tpu_custom_call.1} parent=55 // pred_check
          %p305 = pneg %p40
        $region58: #{tpu_custom_call.1} parent=55 // pred_check_branch
          %307 = sbr.rel (%p305) target = $region60
        $region59: #{tpu_custom_call.1} parent=55 // pred_region
          %308 = dma.done [#allocation4], 16
        $region60: #{tpu_custom_call.1} parent=55 // pred_fallthru
          _
        %309 = sfence
        %p310 = pneg %p40
        %p311 = pneg %p37
        %s312 = smul.u32 4, %s24
        %p313 = scmp.lt.s32.totalorder %s312, 7
        %s314 = scalar_select %p313, %s312, 7
        %s315 = scalar_lea.vmem %s1, %s314
        %p316 = pneg %p66
        %p317 = pneg %p63
        %p318 = pneg %p87
        %p319 = pneg %p84
        %p320 = pneg %p108
        %p321 = pneg %p105
        %p322 = pneg %p129
        %p323 = pneg %p126
        %p324 = pneg %p150
        %p325 = pneg %p147
        %p326 = pneg %p171
        %p327 = pneg %p168
        %p328 = pneg %p192
        %p329 = pneg %p189
        %p330 = pneg %p213
        %p331 = pneg %p210
        %p332 = pneg %p239
        %p333 = pneg %p236
        %s334 = sand.u32 %s226, 1
        %s335 = scalar_lea.sflag [#allocation3], %s334
        %s336 = sand.u32 %s226, 1
        %s337 = smul.addr %s336, 4
        %s338 = scalar_lea.vmem [#allocation5], %s337
        %s339 = smul.u32 4, %s24
        %p340 = scmp.lt.s32.totalorder %s339, 7
        %s341 = scalar_select %p340, %s339, 7
        %s342 = scalar_lea.vmem %s1, %s341
        %s343 = smul.u32 4, %s24
        %s344 = smul.u32 4, %s24
        %s346 = sld [smem:[#allocation2]]
        %s347 = sld [smem:[#allocation2 + $0x2]]
        %s348 = sld [smem:[#allocation2 + $0x3]]
        %s349 = sld [smem:[#allocation2 + $0x4]]
        %s350 = sld [smem:[#allocation2 + $0x5]]
        %v351 = vld [vmem:[%s342] sm:$0xf]
        %v352 = vstv %s347
        %v353 = vmul.f32 %v351, %v352
        %v354 = vstv %s348
        %v355 = vadd.f32 %v353, %v354
        %v356 = vld [vmem:[%s2] sm:$0xff]
        %v357 = vld [vmem:[%s2 + $0x8] sm:$0xff]
        %v358 = vld [vmem:[%s2 + $0x10] sm:$0xff]
        %v359 = vld [vmem:[%s2 + $0x18] sm:$0xff]
        %361 = vset.pattern.permute.xlu0 0
        %362 = vperm.xlu0 %361, %v356
        %v363 = vpop.permute.xlu0 %362
        %366 = vset.pattern.permute.xlu0 0
        %367 = vperm.xlu0 %366, %v357
        %v368 = vpop.permute.xlu0 %367
        %371 = vset.pattern.permute.xlu0 0
        %372 = vperm.xlu0 %371, %v358
        %v373 = vpop.permute.xlu0 %372
        %376 = vset.pattern.permute.xlu0 0
        %377 = vperm.xlu0 %376, %v359
        %v378 = vpop.permute.xlu0 %377
        %v381 = vlaneseq
        %v382 = vshrl.u32 %v381, 7
        %v383 = vsub.s32 0, %v382
        %v384 = vrot.slane %v355, %v383
        %v385 = vlaneseq
        %v386 = vshrl.u32 %v385, 7
        %v387 = vsub.s32 1, %v386
        %v388 = vrot.slane %v355, %v387
        %v389 = vlaneseq
        %v390 = vshrl.u32 %v389, 7
        %v391 = vsub.s32 2, %v390
        %v392 = vrot.slane %v355, %v391
        %v393 = vlaneseq
        %v394 = vshrl.u32 %v393, 7
        %v395 = vsub.s32 3, %v394
        %v396 = vrot.slane %v355, %v395
        %v401 = vmul.f32 %v363, %v384
        %v402 = vmul.f32 %v363, %v388
        %v403 = vmul.f32 %v363, %v392
        %v404 = vmul.f32 %v363, %v396
        %v405 = vmul.f32 %v368, %v384
        %v406 = vmul.f32 %v368, %v388
        %v407 = vmul.f32 %v368, %v392
        %v408 = vmul.f32 %v368, %v396
        %v409 = vmul.f32 %v373, %v384
        %v410 = vmul.f32 %v373, %v388
        %v411 = vmul.f32 %v373, %v392
        %v412 = vmul.f32 %v373, %v396
        %v413 = vmul.f32 %v378, %v384
        %v414 = vmul.f32 %v378, %v388
        %v415 = vmul.f32 %v378, %v392
        %v416 = vmul.f32 %v378, %v396
        %v417 = vld [vmem:[%s3] sm:$0xff]
        %v418 = vld [vmem:[%s3 + $0x8] sm:$0xff]
        %v419 = vld [vmem:[%s3 + $0x10] sm:$0xff]
        %v420 = vld [vmem:[%s3 + $0x18] sm:$0xff]
        %422 = vset.pattern.permute.xlu0 0
        %423 = vperm.xlu0 %422, %v417
        %v424 = vpop.permute.xlu0 %423
        %427 = vset.pattern.permute.xlu0 0
        %428 = vperm.xlu0 %427, %v418
        %v429 = vpop.permute.xlu0 %428
        %432 = vset.pattern.permute.xlu0 0
        %433 = vperm.xlu0 %432, %v419
        %v434 = vpop.permute.xlu0 %433
        %437 = vset.pattern.permute.xlu0 0
        %438 = vperm.xlu0 %437, %v420
        %v439 = vpop.permute.xlu0 %438
        %v441 = vadd.f32 %v401, %v424
        %v442 = vadd.f32 %v402, %v424
        %v443 = vadd.f32 %v403, %v424
        %v444 = vadd.f32 %v404, %v424
        %v445 = vadd.f32 %v405, %v429
        %v446 = vadd.f32 %v406, %v429
        %v447 = vadd.f32 %v407, %v429
        %v448 = vadd.f32 %v408, %v429
        %v449 = vadd.f32 %v409, %v434
        %v450 = vadd.f32 %v410, %v434
        %v451 = vadd.f32 %v411, %v434
        %v452 = vadd.f32 %v412, %v434
        %v453 = vadd.f32 %v413, %v439
        %v454 = vadd.f32 %v414, %v439
        %v455 = vadd.f32 %v415, %v439
        %v456 = vadd.f32 %v416, %v439
        %v457 = vtanh.pop %v441
        %v458 = vtanh.pop %v442
        %v459 = vtanh.pop %v443
        %v460 = vtanh.pop %v444
        %v461 = vtanh.pop %v445
        %v462 = vtanh.pop %v446
        %v463 = vtanh.pop %v447
        %v464 = vtanh.pop %v448
        %v465 = vtanh.pop %v449
        %v466 = vtanh.pop %v450
        %v467 = vtanh.pop %v451
        %v468 = vtanh.pop %v452
        %v469 = vtanh.pop %v453
        %v470 = vtanh.pop %v454
        %v471 = vtanh.pop %v455
        %v472 = vtanh.pop %v456
        %v473 = vld [vmem:[%s4] sm:$0xf]
        %v474 = vld [vmem:[%s4 + $0x4] sm:$0xf]
        %v475 = vld [vmem:[%s4 + $0x8] sm:$0xf]
        %v476 = vld [vmem:[%s4 + $0xc] sm:$0xf]
        %v477 = vpack.c.bf16 %v461, %v457
        %v478 = vpack.c.bf16 %v462, %v458
        %v479 = vpack.c.bf16 %v463, %v459
        %v480 = vpack.c.bf16 %v464, %v460
        %v481 = vpack.c.bf16 %v469, %v465
        %v482 = vpack.c.bf16 %v470, %v466
        %v483 = vpack.c.bf16 %v471, %v467
        %v484 = vpack.c.bf16 %v472, %v468
        %v485 = vld [vmem:[%s5] sm:$0xff]
        %v486 = vld [vmem:[%s5 + $0x8] sm:$0xff]
        %v487 = vld [vmem:[%s5 + $0x10] sm:$0xff]
        %v488 = vld [vmem:[%s5 + $0x18] sm:$0xff]
        %490 = vset.pattern.permute.xlu0 0
        %491 = vperm.xlu0 %490, %v485
        %v492 = vpop.permute.xlu0 %491
        %495 = vset.pattern.permute.xlu0 0
        %496 = vperm.xlu0 %495, %v486
        %v497 = vpop.permute.xlu0 %496
        %500 = vset.pattern.permute.xlu0 0
        %501 = vperm.xlu0 %500, %v487
        %v502 = vpop.permute.xlu0 %501
        %505 = vset.pattern.permute.xlu0 0
        %506 = vperm.xlu0 %505, %v488
        %v507 = vpop.permute.xlu0 %506
        %v513 = vunpack.c.l.b16 %v473
        %v514 = vunpack.c.l.b16 %v474
        %v515 = vunpack.c.l.b16 %v475
        %v516 = vunpack.c.l.b16 %v476
        %v517 = vpack.c.b16 %v514, %v513
        %v518 = vpack.c.b16 %v516, %v515
        %vm519 = vcmask 261120
        %v521 = vsel %vm519, %v517, 0
        %v524 = vsel %vm519, %v518, 0
        %526 = vmatprep.subr.bf16.mxu0 %v478
        %527 = vmatpush1.bf16.msra.mxu0 %v477
        %528 = vmatprep.subr.bf16.mxu0 %v482
        %529 = vmatpush1.bf16.msra.mxu0 %v481
        %530 = vmatprep.subr.bf16.mxu0 0
        %531 = vmatpush1.bf16.msra.mxu0 0
        %532 = vmatprep.subr.bf16.mxu0 0
        %533 = vmatpush1.bf16.msra.mxu0 0
        %534 = vmatprep.subr.bf16.mxu0 0
        %535 = vmatpush1.bf16.msra.mxu0 0
        %536 = vmatprep.subr.bf16.mxu0 0
        %537 = vmatpush1.bf16.msra.mxu0 0
        %538 = vmatprep.subr.bf16.mxu0 0
        %539 = vmatpush1.bf16.msra.mxu0 0
        %540 = vmatprep.subr.bf16.mxu0 0
        %541 = vmatpush1.bf16.msra.mxu0 0
        %542 = vmatprep.subr.bf16.mxu0 0
        %543 = vmatpush1.bf16.msra.mxu0 0
        %544 = vmatprep.subr.bf16.mxu0 0
        %545 = vmatpush1.bf16.msra.mxu0 0
        %546 = vmatprep.subr.bf16.mxu0 0
        %547 = vmatpush1.bf16.msra.mxu0 0
        %548 = vmatprep.subr.bf16.mxu0 0
        %549 = vmatpush1.bf16.msra.mxu0 0
        %550 = vmatprep.subr.bf16.mxu0 0
        %551 = vmatpush1.bf16.msra.mxu0 0
        %552 = vmatprep.subr.bf16.mxu0 0
        %553 = vmatpush1.bf16.msra.mxu0 0
        %554 = vmatprep.subr.bf16.mxu0 0
        %555 = vmatpush1.bf16.msra.mxu0 0
        %556 = vmatprep.subr.bf16.mxu0 0
        %557 = vmatpush1.bf16.msra.mxu0 0
        %558 = vmatprep.mubr.bf16.mxu0 0
        %559 = vmatmul.mubr.bf16.gmra.mrb[0].mxu0 %v521
        %v560 = vpop.f32.mrb[0].mxu0
        %v561 = vadd.f32 %v492, %v560
        %v562 = vpop.f32.mrb[0].mxu0
        %v563 = vadd.f32 %v492, %v562
        %v564 = vpop.f32.mrb[0].mxu0
        %v565 = vadd.f32 %v497, %v564
        %v566 = vpop.f32.mrb[0].mxu0
        %v567 = vadd.f32 %v497, %v566
        %568 = vmatprep.mubr.bf16.mxu0 0
        %569 = vmatmul.mubr.bf16.gmra.mrb[0].mxu0 %v524
        %v570 = vpop.f32.mrb[0].mxu0
        %v571 = vadd.f32 %v502, %v570
        %v572 = vpop.f32.mrb[0].mxu0
        %v573 = vadd.f32 %v502, %v572
        %v574 = vpop.f32.mrb[0].mxu0
        %v575 = vadd.f32 %v507, %v574
        %v576 = vpop.f32.mrb[0].mxu0
        %v577 = vadd.f32 %v507, %v576
        %578 = vdwg.mxu0
        %579 = vmatprep.subr.bf16.mxu0 %v480
        %580 = vmatpush1.bf16.msra.mxu0 %v479
        %581 = vmatprep.subr.bf16.mxu0 %v484
        %582 = vmatpush1.bf16.msra.mxu0 %v483
        %583 = vmatprep.subr.bf16.mxu0 0
        %584 = vmatpush1.bf16.msra.mxu0 0
        %585 = vmatprep.subr.bf16.mxu0 0
        %586 = vmatpush1.bf16.msra.mxu0 0
        %587 = vmatprep.subr.bf16.mxu0 0
        %588 = vmatpush1.bf16.msra.mxu0 0
        %589 = vmatprep.subr.bf16.mxu0 0
        %590 = vmatpush1.bf16.msra.mxu0 0
        %591 = vmatprep.subr.bf16.mxu0 0
        %592 = vmatpush1.bf16.msra.mxu0 0
        %593 = vmatprep.subr.bf16.mxu0 0
        %594 = vmatpush1.bf16.msra.mxu0 0
        %595 = vmatprep.subr.bf16.mxu0 0
        %596 = vmatpush1.bf16.msra.mxu0 0
        %597 = vmatprep.subr.bf16.mxu0 0
        %598 = vmatpush1.bf16.msra.mxu0 0
        %599 = vmatprep.subr.bf16.mxu0 0
        %600 = vmatpush1.bf16.msra.mxu0 0
        %601 = vmatprep.subr.bf16.mxu0 0
        %602 = vmatpush1.bf16.msra.mxu0 0
        %603 = vmatprep.subr.bf16.mxu0 0
        %604 = vmatpush1.bf16.msra.mxu0 0
        %605 = vmatprep.subr.bf16.mxu0 0
        %606 = vmatpush1.bf16.msra.mxu0 0
        %607 = vmatprep.subr.bf16.mxu0 0
        %608 = vmatpush1.bf16.msra.mxu0 0
        %609 = vmatprep.subr.bf16.mxu0 0
        %610 = vmatpush1.bf16.msra.mxu0 0
        %611 = vmatprep.mubr.bf16.mxu0 0
        %612 = vmatmul.mubr.bf16.gmra.mrb[0].mxu0 %v521
        %v613 = vpop.f32.mrb[0].mxu0
        %v614 = vadd.f32 %v492, %v613
        %v615 = vpop.f32.mrb[0].mxu0
        %v616 = vadd.f32 %v492, %v615
        %v617 = vpop.f32.mrb[0].mxu0
        %v618 = vadd.f32 %v497, %v617
        %v619 = vpop.f32.mrb[0].mxu0
        %v620 = vadd.f32 %v497, %v619
        %621 = vmatprep.mubr.bf16.mxu0 0
        %622 = vmatmul.mubr.bf16.gmra.mrb[0].mxu0 %v524
        %v623 = vpop.f32.mrb[0].mxu0
        %v624 = vadd.f32 %v502, %v623
        %v625 = vpop.f32.mrb[0].mxu0
        %v626 = vadd.f32 %v502, %v625
        %v627 = vpop.f32.mrb[0].mxu0
        %v628 = vadd.f32 %v507, %v627
        %v629 = vpop.f32.mrb[0].mxu0
        %v630 = vadd.f32 %v507, %v629
        %631 = vdwg.mxu0
        %v632 = vtanh.pop %v561
        %v633 = vtanh.pop %v563
        %v634 = vtanh.pop %v614
        %v635 = vtanh.pop %v616
        %v636 = vtanh.pop %v565
        %v637 = vtanh.pop %v567
        %v638 = vtanh.pop %v618
        %v639 = vtanh.pop %v620
        %v640 = vtanh.pop %v571
        %v641 = vtanh.pop %v573
        %v642 = vtanh.pop %v624
        %v643 = vtanh.pop %v626
        %v644 = vtanh.pop %v575
        %v645 = vtanh.pop %v577
        %v646 = vtanh.pop %v628
        %v647 = vtanh.pop %v630
        %v648 = vld [vmem:[%s6] sm:$0xf]
        %v649 = vld [vmem:[%s6 + $0x4] sm:$0xf]
        %v650 = vld [vmem:[%s6 + $0x8] sm:$0xf]
        %v651 = vld [vmem:[%s6 + $0xc] sm:$0xf]
        %v652 = vpack.c.bf16 %v636, %v632
        %v653 = vpack.c.bf16 %v637, %v633
        %v654 = vpack.c.bf16 %v638, %v634
        %v655 = vpack.c.bf16 %v639, %v635
        %v656 = vpack.c.bf16 %v644, %v640
        %v657 = vpack.c.bf16 %v645, %v641
        %v658 = vpack.c.bf16 %v646, %v642
        %v659 = vpack.c.bf16 %v647, %v643
        %v660 = vld [vmem:[%s7] sm:$0xff]
        %v661 = vld [vmem:[%s7 + $0x8] sm:$0xff]
        %v662 = vld [vmem:[%s7 + $0x10] sm:$0xff]
        %v663 = vld [vmem:[%s7 + $0x18] sm:$0xff]
        %665 = vset.pattern.permute.xlu0 0
        %666 = vperm.xlu0 %665, %v660
        %v667 = vpop.permute.xlu0 %666
        %670 = vset.pattern.permute.xlu0 0
        %671 = vperm.xlu0 %670, %v661
        %v672 = vpop.permute.xlu0 %671
        %675 = vset.pattern.permute.xlu0 0
        %676 = vperm.xlu0 %675, %v662
        %v677 = vpop.permute.xlu0 %676
        %680 = vset.pattern.permute.xlu0 0
        %681 = vperm.xlu0 %680, %v663
        %v682 = vpop.permute.xlu0 %681
        %v688 = vunpack.c.l.b16 %v648
        %v689 = vunpack.c.l.b16 %v649
        %v690 = vunpack.c.l.b16 %v650
        %v691 = vunpack.c.l.b16 %v651
        %v692 = vpack.c.b16 %v689, %v688
        %v693 = vpack.c.b16 %v691, %v690
        %v695 = vsel %vm519, %v692, 0
        %v698 = vsel %vm519, %v693, 0
        %700 = vmatprep.subr.bf16.mxu0 %v653
        %701 = vmatpush1.bf16.msra.mxu0 %v652
        %702 = vmatprep.subr.bf16.mxu0 %v657
        %703 = vmatpush1.bf16.msra.mxu0 %v656
        %704 = vmatprep.subr.bf16.mxu0 0
        %705 = vmatpush1.bf16.msra.mxu0 0
        %706 = vmatprep.subr.bf16.mxu0 0
        %707 = vmatpush1.bf16.msra.mxu0 0
        %708 = vmatprep.subr.bf16.mxu0 0
        %709 = vmatpush1.bf16.msra.mxu0 0
        %710 = vmatprep.subr.bf16.mxu0 0
        %711 = vmatpush1.bf16.msra.mxu0 0
        %712 = vmatprep.subr.bf16.mxu0 0
        %713 = vmatpush1.bf16.msra.mxu0 0
        %714 = vmatprep.subr.bf16.mxu0 0
        %715 = vmatpush1.bf16.msra.mxu0 0
        %716 = vmatprep.subr.bf16.mxu0 0
        %717 = vmatpush1.bf16.msra.mxu0 0
        %718 = vmatprep.subr.bf16.mxu0 0
        %719 = vmatpush1.bf16.msra.mxu0 0
        %720 = vmatprep.subr.bf16.mxu0 0
        %721 = vmatpush1.bf16.msra.mxu0 0
        %722 = vmatprep.subr.bf16.mxu0 0
        %723 = vmatpush1.bf16.msra.mxu0 0
        %724 = vmatprep.subr.bf16.mxu0 0
        %725 = vmatpush1.bf16.msra.mxu0 0
        %726 = vmatprep.subr.bf16.mxu0 0
        %727 = vmatpush1.bf16.msra.mxu0 0
        %728 = vmatprep.subr.bf16.mxu0 0
        %729 = vmatpush1.bf16.msra.mxu0 0
        %730 = vmatprep.subr.bf16.mxu0 0
        %731 = vmatpush1.bf16.msra.mxu0 0
        %732 = vmatprep.mubr.bf16.mxu0 0
        %733 = vmatmul.mubr.bf16.gmra.mrb[0].mxu0 %v695
        %v734 = vpop.f32.mrb[0].mxu0
        %v735 = vadd.f32 %v667, %v734
        %v736 = vpop.f32.mrb[0].mxu0
        %v737 = vadd.f32 %v667, %v736
        %v738 = vpop.f32.mrb[0].mxu0
        %v739 = vadd.f32 %v672, %v738
        %v740 = vpop.f32.mrb[0].mxu0
        %v741 = vadd.f32 %v672, %v740
        %742 = vmatprep.mubr.bf16.mxu0 0
        %743 = vmatmul.mubr.bf16.gmra.mrb[0].mxu0 %v698
        %v744 = vpop.f32.mrb[0].mxu0
        %v745 = vadd.f32 %v677, %v744
        %v746 = vpop.f32.mrb[0].mxu0
        %v747 = vadd.f32 %v677, %v746
        %v748 = vpop.f32.mrb[0].mxu0
        %v749 = vadd.f32 %v682, %v748
        %v750 = vpop.f32.mrb[0].mxu0
        %v751 = vadd.f32 %v682, %v750
        %752 = vdwg.mxu0
        %753 = vmatprep.subr.bf16.mxu0 %v655
        %754 = vmatpush1.bf16.msra.mxu0 %v654
        %755 = vmatprep.subr.bf16.mxu0 %v659
        %756 = vmatpush1.bf16.msra.mxu0 %v658
        %757 = vmatprep.subr.bf16.mxu0 0
        %758 = vmatpush1.bf16.msra.mxu0 0
        %759 = vmatprep.subr.bf16.mxu0 0
        %760 = vmatpush1.bf16.msra.mxu0 0
        %761 = vmatprep.subr.bf16.mxu0 0
        %762 = vmatpush1.bf16.msra.mxu0 0
        %763 = vmatprep.subr.bf16.mxu0 0
        %764 = vmatpush1.bf16.msra.mxu0 0
        %765 = vmatprep.subr.bf16.mxu0 0
        %766 = vmatpush1.bf16.msra.mxu0 0
        %767 = vmatprep.subr.bf16.mxu0 0
        %768 = vmatpush1.bf16.msra.mxu0 0
        %769 = vmatprep.subr.bf16.mxu0 0
        %770 = vmatpush1.bf16.msra.mxu0 0
        %771 = vmatprep.subr.bf16.mxu0 0
        %772 = vmatpush1.bf16.msra.mxu0 0
        %773 = vmatprep.subr.bf16.mxu0 0
        %774 = vmatpush1.bf16.msra.mxu0 0
        %775 = vmatprep.subr.bf16.mxu0 0
        %776 = vmatpush1.bf16.msra.mxu0 0
        %777 = vmatprep.subr.bf16.mxu0 0
        %778 = vmatpush1.bf16.msra.mxu0 0
        %779 = vmatprep.subr.bf16.mxu0 0
        %780 = vmatpush1.bf16.msra.mxu0 0
        %781 = vmatprep.subr.bf16.mxu0 0
        %782 = vmatpush1.bf16.msra.mxu0 0
        %783 = vmatprep.subr.bf16.mxu0 0
        %784 = vmatpush1.bf16.msra.mxu0 0
        %785 = vmatprep.mubr.bf16.mxu0 0
        %786 = vmatmul.mubr.bf16.gmra.mrb[0].mxu0 %v695
        %v787 = vpop.f32.mrb[0].mxu0
        %v788 = vadd.f32 %v667, %v787
        %v789 = vpop.f32.mrb[0].mxu0
        %v790 = vadd.f32 %v667, %v789
        %v791 = vpop.f32.mrb[0].mxu0
        %v792 = vadd.f32 %v672, %v791
        %v793 = vpop.f32.mrb[0].mxu0
        %v794 = vadd.f32 %v672, %v793
        %795 = vmatprep.mubr.bf16.mxu0 0
        %796 = vmatmul.mubr.bf16.gmra.mrb[0].mxu0 %v698
        %v797 = vpop.f32.mrb[0].mxu0
        %v798 = vadd.f32 %v677, %v797
        %v799 = vpop.f32.mrb[0].mxu0
        %v800 = vadd.f32 %v677, %v799
        %v801 = vpop.f32.mrb[0].mxu0
        %v802 = vadd.f32 %v682, %v801
        %v803 = vpop.f32.mrb[0].mxu0
        %v804 = vadd.f32 %v682, %v803
        %805 = vdwg.mxu0
        %v806 = vtanh.pop %v735
        %v807 = vtanh.pop %v737
        %v808 = vtanh.pop %v788
        %v809 = vtanh.pop %v790
        %v810 = vtanh.pop %v739
        %v811 = vtanh.pop %v741
        %v812 = vtanh.pop %v792
        %v813 = vtanh.pop %v794
        %v814 = vtanh.pop %v745
        %v815 = vtanh.pop %v747
        %v816 = vtanh.pop %v798
        %v817 = vtanh.pop %v800
        %v818 = vtanh.pop %v749
        %v819 = vtanh.pop %v751
        %v820 = vtanh.pop %v802
        %v821 = vtanh.pop %v804
        %v822 = vld [vmem:[%s8] sm:$0x1]
        %v823 = vpack.c.bf16 %v810, %v806
        %v824 = vpack.c.bf16 %v811, %v807
        %v825 = vpack.c.bf16 %v812, %v808
        %v826 = vpack.c.bf16 %v813, %v809
        %v827 = vpack.c.bf16 %v818, %v814
        %v828 = vpack.c.bf16 %v819, %v815
        %v829 = vpack.c.bf16 %v820, %v816
        %v830 = vpack.c.bf16 %v821, %v817
        %v831 = vstv %s350
        %v833 = vsel %vm519, %v822, 0
        %835 = vmatprep.subr.bf16.mxu0 %v824
        %836 = vmatpush1.bf16.msra.mxu0 %v823
        %837 = vmatprep.subr.bf16.mxu0 %v828
        %838 = vmatpush1.bf16.msra.mxu0 %v827
        %839 = vmatprep.subr.bf16.mxu0 0
        %840 = vmatpush1.bf16.msra.mxu0 0
        %841 = vmatprep.subr.bf16.mxu0 0
        %842 = vmatpush1.bf16.msra.mxu0 0
        %843 = vmatprep.subr.bf16.mxu0 0
        %844 = vmatpush1.bf16.msra.mxu0 0
        %845 = vmatprep.subr.bf16.mxu0 0
        %846 = vmatpush1.bf16.msra.mxu0 0
        %847 = vmatprep.subr.bf16.mxu0 0
        %848 = vmatpush1.bf16.msra.mxu0 0
        %849 = vmatprep.subr.bf16.mxu0 0
        %850 = vmatpush1.bf16.msra.mxu0 0
        %851 = vmatprep.subr.bf16.mxu0 0
        %852 = vmatpush1.bf16.msra.mxu0 0
        %853 = vmatprep.subr.bf16.mxu0 0
        %854 = vmatpush1.bf16.msra.mxu0 0
        %855 = vmatprep.subr.bf16.mxu0 0
        %856 = vmatpush1.bf16.msra.mxu0 0
        %857 = vmatprep.subr.bf16.mxu0 0
        %858 = vmatpush1.bf16.msra.mxu0 0
        %859 = vmatprep.subr.bf16.mxu0 0
        %860 = vmatpush1.bf16.msra.mxu0 0
        %861 = vmatprep.subr.bf16.mxu0 0
        %862 = vmatpush1.bf16.msra.mxu0 0
        %863 = vmatprep.subr.bf16.mxu0 0
        %864 = vmatpush1.bf16.msra.mxu0 0
        %865 = vmatprep.subr.bf16.mxu0 0
        %866 = vmatpush1.bf16.msra.mxu0 0
        %867 = vmatprep.mubr.bf16.mxu0 0
        %868 = vmatmul.mubr.bf16.gmra.mrb[0].mxu0 %v833
        %v869 = vpop.f32.mrb[0].mxu0
        %v870 = vadd.f32 %v831, %v869
        %v871 = vpop.f32.mrb[0].mxu0
        %v872 = vadd.f32 %v831, %v871
        %v873 = vpop.f32.mrb[0].mxu0
        %v874 = vpop.f32.mrb[0].mxu0
        %875 = vdwg.mxu0
        %876 = vmatprep.subr.bf16.mxu0 %v826
        %877 = vmatpush1.bf16.msra.mxu0 %v825
        %878 = vmatprep.subr.bf16.mxu0 %v830
        %879 = vmatpush1.bf16.msra.mxu0 %v829
        %880 = vmatprep.subr.bf16.mxu0 0
        %881 = vmatpush1.bf16.msra.mxu0 0
        %882 = vmatprep.subr.bf16.mxu0 0
        %883 = vmatpush1.bf16.msra.mxu0 0
        %884 = vmatprep.subr.bf16.mxu0 0
        %885 = vmatpush1.bf16.msra.mxu0 0
        %886 = vmatprep.subr.bf16.mxu0 0
        %887 = vmatpush1.bf16.msra.mxu0 0
        %888 = vmatprep.subr.bf16.mxu0 0
        %889 = vmatpush1.bf16.msra.mxu0 0
        %890 = vmatprep.subr.bf16.mxu0 0
        %891 = vmatpush1.bf16.msra.mxu0 0
        %892 = vmatprep.subr.bf16.mxu0 0
        %893 = vmatpush1.bf16.msra.mxu0 0
        %894 = vmatprep.subr.bf16.mxu0 0
        %895 = vmatpush1.bf16.msra.mxu0 0
        %896 = vmatprep.subr.bf16.mxu0 0
        %897 = vmatpush1.bf16.msra.mxu0 0
        %898 = vmatprep.subr.bf16.mxu0 0
        %899 = vmatpush1.bf16.msra.mxu0 0
        %900 = vmatprep.subr.bf16.mxu0 0
        %901 = vmatpush1.bf16.msra.mxu0 0
        %902 = vmatprep.subr.bf16.mxu0 0
        %903 = vmatpush1.bf16.msra.mxu0 0
        %904 = vmatprep.subr.bf16.mxu0 0
        %905 = vmatpush1.bf16.msra.mxu0 0
        %906 = vmatprep.subr.bf16.mxu0 0
        %907 = vmatpush1.bf16.msra.mxu0 0
        %908 = vmatprep.mubr.bf16.mxu0 0
        %909 = vmatmul.mubr.bf16.gmra.mrb[0].mxu0 %v833
        %v910 = vpop.f32.mrb[0].mxu0
        %v911 = vadd.f32 %v831, %v910
        %v912 = vpop.f32.mrb[0].mxu0
        %v913 = vadd.f32 %v831, %v912
        %v914 = vpop.f32.mrb[0].mxu0
        %v915 = vpop.f32.mrb[0].mxu0
        %916 = vdwg.mxu0
        %v917 = vstv %s346
        %v918 = vsub.f32 %v917, %v351
        %v919 = vmul.f32 %v918, 1.442695
        %v920 = vpow.pop %v919
        %v921 = vsub.f32 1.0, %v920
        %v922 = vstv %s349
        %v923 = vmul.f32 %v920, %v922
        %v924 = vsub.f32 1.0, %v923
        %v925 = vmul.f32 %v921, %v924
        %v930 = vcombine.low %v870, %v872
        %v931 = vcombine.low %v911, %v913
        %v933 = vunpack.c.l.s4 1966171168
        %v934 = vunpack.c.0.s8 %v933
        %v935 = vlaneseq
        %v936 = vshrl.u32 %v935, 7
        %v937 = vsub.s32 %v934, %v936
        %v938 = vrot.slane %v930, %v937
        %v940 = vunpack.c.l.s4 1966171168
        %v941 = vunpack.c.0.s8 %v940
        %v942 = vlaneseq
        %v943 = vshrl.u32 %v942, 7
        %v944 = vsub.s32 %v941, %v943
        %v945 = vrot.slane %v931, %v944
        %v946 = vcombine.low %v938, %v945
        %v948 = vunpack.c.l.s4 1966171168
        %v949 = vunpack.c.0.s8 %v948
        %v950 = vlaneseq
        %v951 = vshrl.u32 %v950, 7
        %v952 = vsub.s32 %v949, %v951
        %v953 = vrot.slane %v946, %v952
        %v955 = vmul.f32 %v925, %v953
        %v956 = vadd.f32 %v955, %v351
        %v957 = vlaneseq
        %vm958 = vcmp.ge.s32.totalorder %v957, 0
        %vm959 = vcmp.lt.s32.totalorder %v957, 512
        %vm960 = vmand %vm958, %vm959
        %961 = vst.msk [vmem:[%s338] sm:$0xf] %vm960, %v956
        %s962 = sand.u32 %s226, 1
        %s963 = scalar_lea.sflag [#allocation3], %s962
        %s964 = sand.u32 %s226, 1
        %s965 = smul.addr %s964, 4
        %s966 = scalar_lea.vmem [#allocation5], %s965
        // Predicated region
        $region61: #{tpu_custom_call.1} parent=55 // pred_check
          %p967 = pneg %p236
        $region62: #{tpu_custom_call.1} parent=55 // pred_check_branch
          %969 = sbr.rel (%p967) target = $region64
        $region63: #{tpu_custom_call.1} parent=55 // pred_region
          %s970 = smul.u32 4, %s24
          %s972 = ssub.s32 64, 64
          %973 = vsyncadd %s963, %s972
          %s974 = smul.addr %s970, 16
          %s975 = scalar_lea.hbm %s9, %s974
          %s977 = sshll.u32 %s966, 4
          %s978 = int_to_ptr.vmem [resolvable:$true] %s977
          %980 = dma.vmem_to_hbm [thread:$0]  %s978, 64, %s975, %s963
        $region64: #{tpu_custom_call.1} parent=55 // pred_fallthru
          _
      $region56: #{tpu_custom_call.1} parent=5 // pred_fallthru
        _
      %p981 = scmp.le.s32.totalorder 2, %s19
      // Predicated region
      $region65: #{tpu_custom_call.1} parent=5 // pred_check
        %p982 = pneg %p981
      $region66: #{tpu_custom_call.1} parent=5 // pred_check_branch
        %984 = sbr.rel (%p982) target = $region68
      $region67: #{tpu_custom_call.1} parent=5 // pred_region
        %s985 = ssub.s32 %s19, 2
        // Predicated region
        $region69: #{tpu_custom_call.1} parent=67 // pred_check
          %p986 = pneg %p242
        $region70: #{tpu_custom_call.1} parent=67 // pred_check_branch
          %988 = sbr.rel (%p986) target = $region72
        $region71: #{tpu_custom_call.1} parent=67 // pred_region
          %s989 = sand.u32 %s227, 1
          %s990 = scalar_lea.sflag [#allocation3], %s989
          %s991 = sand.u32 %s227, 1
          %s992 = smul.addr %s991, 4
          %s993 = scalar_lea.vmem [#allocation5], %s992
          %994 = dma.done %s990, 64
        $region72: #{tpu_custom_call.1} parent=67 // pred_fallthru
          _
      $region68: #{tpu_custom_call.1} parent=5 // pred_fallthru
        _
    $region6: #{tpu_custom_call.1} parent=1 // loop_footer
      %s23 = sadd.s32 1, %s19
    $region7: #{tpu_custom_call.1} parent=1 // loop_footer_branch
      %18 = sbr.rel target = $region3
    $region8: #{tpu_custom_call.1} parent=1 // loop_exit
      _
    %995 = vsyncpa [#allocation3], 1
    %s996 = scalar_lea.sflag [#allocation3], 1
    %997 = vsyncpa %s996, 1
    %998 = vsyncpa [#allocation4], 1
    %s999 = scalar_lea.sflag [#allocation4], 1
    %1000 = vsyncpa %s999, 1

</llo_original>
